<compile_context>
chip_gen: v7x
topology: tpu7x:2x2x1
jax: 0.10.0
libtpu: 0.0.40
codegen_flags: <defaults>
</compile_context>

<pallas_src>
import jax
import jax.numpy as jnp
from jax.experimental import pallas as pl
from jax.experimental.pallas import tpu as pltpu

RADIUS = 1
EPSILON = 1e-8
_LANE = 128
_SUBLANE = 8


def _round_up(x, m):
    return ((x + m - 1) // m) * m


def _make_kernel(radius, eps):
    """Kernel over one packed, guard-banded tile of shape (Hb, Lb)."""

    def kernel(invc_ref, i_ref, p_ref, o_ref):
        I = i_ref[...].astype(jnp.float32)
        P = p_ref[...].astype(jnp.float32)
        inv_cnt = invc_ref[...]
        Hb, Lb = I.shape

        def box_mean(x):
            # Separable (2r+1)^2 window SUM.  Guard-band layout: every roll
            # wrap-around (channel boundaries, image W/H edges, image stacking
            # boundaries) only pulls zeros, so no masks/selects are needed.
            row = x
            for s in range(1, radius + 1):
                row = row + pltpu.roll(x, shift=s, axis=1) \
                          + pltpu.roll(x, shift=Lb - s, axis=1)
            out = row
            for s in range(1, radius + 1):
                out = out + pltpu.roll(row, shift=s, axis=0) \
                          + pltpu.roll(row, shift=Hb - s, axis=0)
            # inv_cnt = 1/valid-window-size on real pixels and 0 on guards,
            # so all means (and hence a, b) are exactly zero in the guards.
            return out * inv_cnt

        mean_I = box_mean(I)
        mean_p = box_mean(P)
        mean_Ip = box_mean(I * P)
        mean_II = box_mean(I * I)
        cov_Ip = mean_Ip - mean_I * mean_p
        var_I = mean_II - mean_I * mean_I

        # Exact reciprocal: approx=True can miss the 1e-5 tolerance where
        # var_I ~ 0 (flat regions).
        a = cov_Ip * pl.reciprocal(var_I + eps, approx=False)
        b = mean_p - a * mean_I

        mean_a = box_mean(a)
        mean_b = box_mean(b)

        o_ref[...] = (mean_a * I + mean_b).astype(o_ref.dtype)

    return kernel


def guided_filter(I, p, radius=RADIUS, eps=EPSILON):
    """Guided filter forward pass. I, p: NCHW arrays of identical shape."""
    assert I.shape == p.shape
    N, C, H, W = I.shape

    # Guard-banded packed layout:
    #   lanes   : [ch0 data (W) | radius zero cols] ... per channel,
    #             tail-padded to a multiple of 128.
    #   sublanes: [image data (H) | zero rows up to a multiple of 8 (>= radius)]
    #             per image; TILE_N images stacked per grid step.
    stride_w = W + radius
    L = C * stride_w
    L_pad = _round_up(L, _LANE)
    stride_h = _round_up(H + radius, _SUBLANE)

    # Batch TILE_N images per grid step (amortizes ~0.35us/step for small
    # planes) while keeping the in-kernel live set well under scoped VMEM.
    plane_bytes = stride_h * L_pad * 4
    vmem_budget = 8 * 1024 * 1024
    tile_n = 1
    for t in range(N, 0, -1):
        if N % t == 0 and 24 * t * plane_bytes <= vmem_budget:
            tile_n = t
            break
    Hb = tile_n * stride_h
    n_steps = N // tile_n

    def pack(x):
        x = jnp.transpose(x, (0, 2, 1, 3))                                # N,H,C,W
        x = jnp.pad(x, ((0, 0), (0, stride_h - H), (0, 0), (0, stride_w - W)))
        x = x.reshape(N, stride_h, L)
        x = jnp.pad(x, ((0, 0), (0, 0), (0, L_pad - L)))
        return x.reshape(n_steps, Hb, L_pad)

    I_packed = pack(I)
    p_packed = pack(p)

    # Precomputed 1/count of the valid (zero-padded) window per pixel.
    # Guards (extra rows/cols) are exactly 0, NOT 1 — required so that a/b
    # stay zero there and nothing leaks back in the second filtering pass.
    ys = jnp.arange(H)
    xs = jnp.arange(W)
    rowcnt = jnp.minimum(ys + radius, H - 1) - jnp.maximum(ys - radius, 0) + 1
    colcnt = jnp.minimum(xs + radius, W - 1) - jnp.maximum(xs - radius, 0) + 1
    inv = 1.0 / (rowcnt[:, None] * colcnt[None, :]).astype(jnp.float32)   # (H, W)
    inv_plane = jnp.zeros((stride_h, C, stride_w), jnp.float32)
    inv_plane = inv_plane.at[:H, :, :W].set(inv[:, None, :])
    inv_plane = jnp.pad(inv_plane.reshape(stride_h, L), ((0, 0), (0, L_pad - L)))
    inv_cnt = jnp.tile(inv_plane, (tile_n, 1))                            # (Hb, L_pad)

    kernel = _make_kernel(radius, eps)

    tile_spec = pl.BlockSpec((None, Hb, L_pad), lambda g: (g, 0, 0))
    const_spec = pl.BlockSpec((Hb, L_pad), lambda g: (0, 0))

    q_packed = pl.pallas_call(
        kernel,
        out_shape=jax.ShapeDtypeStruct((n_steps, Hb, L_pad), I.dtype),
        grid_spec=pltpu.PrefetchScalarGridSpec(
            num_scalar_prefetch=0,
            grid=(n_steps,),
            in_specs=[const_spec, tile_spec, tile_spec],
            out_specs=tile_spec,
        ),
        compiler_params=pltpu.CompilerParams(
            dimension_semantics=("parallel",),
            vmem_limit_bytes=32 * 1024 * 1024,
        ),
    )(inv_cnt, I_packed, p_packed)

    # (n_steps, Hb, L_pad) -> NCHW (drop guards).
    q = q_packed.reshape(N, stride_h, L_pad)[:, :, :L]
    q = q.reshape(N, stride_h, C, stride_w)[:, :H, :, :W]
    return q.transpose(0, 2, 1, 3)


# ----------------------------- plain-JAX reference -----------------------------

def _box_filter_ref(x, radius):
    """Depthwise mean conv with zero padding (NCHW), matching F.conv2d."""
    k = 2 * radius + 1
    xp = jnp.pad(x, ((0, 0), (0, 0), (radius, radius), (radius, radius)))
    H, W = x.shape[2], x.shape[3]
    acc = jnp.zeros_like(x)
    for dy in range(k):
        for dx in range(k):
            acc = acc + xp[:, :, dy:dy + H, dx:dx + W]
    return acc / (k * k)


def _guided_filter_ref(I, p):
    Nc = _box_filter_ref(jnp.ones_like(I), RADIUS)
    mean_I = _box_filter_ref(I, RADIUS) / Nc
    mean_p = _box_filter_ref(p, RADIUS) / Nc
    mean_Ip = _box_filter_ref(I * p, RADIUS) / Nc
    cov_Ip = mean_Ip - mean_I * mean_p
    mean_II = _box_filter_ref(I * I, RADIUS) / Nc
    var_I = mean_II - mean_I * mean_I
    a = cov_Ip / (var_I + EPSILON)
    b = mean_p - a * mean_I
    mean_a = _box_filter_ref(a, RADIUS) / Nc
    mean_b = _box_filter_ref(b, RADIUS) / Nc
    return mean_a * I + mean_b


if __name__ == "__main__":
    key = jax.random.PRNGKey(0)
    k1, k2 = jax.random.split(key)
    shape = (2, 4, 16, 16)  # NCHW
    I = jax.random.uniform(k1, shape, dtype=jnp.float32)
    p = jax.random.uniform(k2, shape, dtype=jnp.float32)

    q = guided_filter(I, p)
    q = jax.block_until_ready(q)

    q_ref = _guided_filter_ref(I, p)
    assert q.shape == shape and q.dtype == jnp.float32
    assert jnp.allclose(q, q_ref, atol=1e-5, rtol=1e-5), "mismatch vs reference"

    print("KERNEL_OK")
</pallas_src>

<mosaic_0001>
module attributes {stable_mosaic.version = 11 : i64} {
  func.func @kernel(%arg0: i32, %arg1: memref<48x128xf32, #tpu.memory_space<vmem>>, %arg2: memref<1x48x128xf32, #tpu.memory_space<vmem>>, %arg3: memref<1x48x128xf32, #tpu.memory_space<vmem>>, %arg4: memref<1x48x128xf32, #tpu.memory_space<vmem>>) attributes {dimension_semantics = [#tpu.dimension_semantics<parallel>], iteration_bounds = array<i64: 1>, scalar_prefetch = 0 : i64, scratch_operands = 0 : i64, tpu.core_type = #tpu.core_type<tc>, window_params = [{pipeline_mode = #tpu.pipeline_mode<synchronous>, transform_indices = @transform_0, window_bounds = array<i64: 48, 128>}, {transform_indices = @transform_1, window_bounds = array<i64: 1, 48, 128>}, {transform_indices = @transform_2, window_bounds = array<i64: 1, 48, 128>}, {transform_indices = @transform_3, window_bounds = array<i64: 1, 48, 128>}]} {
    %c0 = arith.constant 0 : index
    %c0_0 = arith.constant 0 : index
    %c0_1 = arith.constant 0 : index
    %0 = vector.load %arg2[%c0, %c0_0, %c0_1] : memref<1x48x128xf32, #tpu.memory_space<vmem>>, vector<1x48x128xf32>
    %1 = vector.shape_cast %0 : vector<1x48x128xf32> to vector<48x128xf32>
    %c0_2 = arith.constant 0 : index
    %c0_3 = arith.constant 0 : index
    %c0_4 = arith.constant 0 : index
    %2 = vector.load %arg3[%c0_2, %c0_3, %c0_4] : memref<1x48x128xf32, #tpu.memory_space<vmem>>, vector<1x48x128xf32>
    %3 = vector.shape_cast %2 : vector<1x48x128xf32> to vector<48x128xf32>
    %c0_5 = arith.constant 0 : index
    %c0_6 = arith.constant 0 : index
    %4 = vector.load %arg1[%c0_5, %c0_6] : memref<48x128xf32, #tpu.memory_space<vmem>>, vector<48x128xf32>
    %c1_i32 = arith.constant 1 : i32
    %5 = tpu.dynamic_rotate %1 by %c1_i32 dim 1 : vector<48x128xf32>, i32 -> vector<48x128xf32>
    %6 = arith.addf %1, %5 : vector<48x128xf32>
    %c127_i32 = arith.constant 127 : i32
    %7 = tpu.dynamic_rotate %1 by %c127_i32 dim 1 : vector<48x128xf32>, i32 -> vector<48x128xf32>
    %8 = arith.addf %6, %7 : vector<48x128xf32>
    %c1_i32_7 = arith.constant 1 : i32
    %9 = tpu.dynamic_rotate %8 by %c1_i32_7 dim 0 : vector<48x128xf32>, i32 -> vector<48x128xf32>
    %10 = arith.addf %8, %9 : vector<48x128xf32>
    %c47_i32 = arith.constant 47 : i32
    %11 = tpu.dynamic_rotate %8 by %c47_i32 dim 0 : vector<48x128xf32>, i32 -> vector<48x128xf32>
    %12 = arith.addf %10, %11 : vector<48x128xf32>
    %13 = arith.mulf %12, %4 : vector<48x128xf32>
    %c1_i32_8 = arith.constant 1 : i32
    %14 = tpu.dynamic_rotate %3 by %c1_i32_8 dim 1 : vector<48x128xf32>, i32 -> vector<48x128xf32>
    %15 = arith.addf %3, %14 : vector<48x128xf32>
    %c127_i32_9 = arith.constant 127 : i32
    %16 = tpu.dynamic_rotate %3 by %c127_i32_9 dim 1 : vector<48x128xf32>, i32 -> vector<48x128xf32>
    %17 = arith.addf %15, %16 : vector<48x128xf32>
    %c1_i32_10 = arith.constant 1 : i32
    %18 = tpu.dynamic_rotate %17 by %c1_i32_10 dim 0 : vector<48x128xf32>, i32 -> vector<48x128xf32>
    %19 = arith.addf %17, %18 : vector<48x128xf32>
    %c47_i32_11 = arith.constant 47 : i32
    %20 = tpu.dynamic_rotate %17 by %c47_i32_11 dim 0 : vector<48x128xf32>, i32 -> vector<48x128xf32>
    %21 = arith.addf %19, %20 : vector<48x128xf32>
    %22 = arith.mulf %21, %4 : vector<48x128xf32>
    %23 = arith.mulf %1, %3 : vector<48x128xf32>
    %c1_i32_12 = arith.constant 1 : i32
    %24 = tpu.dynamic_rotate %23 by %c1_i32_12 dim 1 : vector<48x128xf32>, i32 -> vector<48x128xf32>
    %25 = arith.addf %23, %24 : vector<48x128xf32>
    %c127_i32_13 = arith.constant 127 : i32
    %26 = tpu.dynamic_rotate %23 by %c127_i32_13 dim 1 : vector<48x128xf32>, i32 -> vector<48x128xf32>
    %27 = arith.addf %25, %26 : vector<48x128xf32>
    %c1_i32_14 = arith.constant 1 : i32
    %28 = tpu.dynamic_rotate %27 by %c1_i32_14 dim 0 : vector<48x128xf32>, i32 -> vector<48x128xf32>
    %29 = arith.addf %27, %28 : vector<48x128xf32>
    %c47_i32_15 = arith.constant 47 : i32
    %30 = tpu.dynamic_rotate %27 by %c47_i32_15 dim 0 : vector<48x128xf32>, i32 -> vector<48x128xf32>
    %31 = arith.addf %29, %30 : vector<48x128xf32>
    %32 = arith.mulf %31, %4 : vector<48x128xf32>
    %33 = arith.mulf %1, %1 : vector<48x128xf32>
    %c1_i32_16 = arith.constant 1 : i32
    %34 = tpu.dynamic_rotate %33 by %c1_i32_16 dim 1 : vector<48x128xf32>, i32 -> vector<48x128xf32>
    %35 = arith.addf %33, %34 : vector<48x128xf32>
    %c127_i32_17 = arith.constant 127 : i32
    %36 = tpu.dynamic_rotate %33 by %c127_i32_17 dim 1 : vector<48x128xf32>, i32 -> vector<48x128xf32>
    %37 = arith.addf %35, %36 : vector<48x128xf32>
    %c1_i32_18 = arith.constant 1 : i32
    %38 = tpu.dynamic_rotate %37 by %c1_i32_18 dim 0 : vector<48x128xf32>, i32 -> vector<48x128xf32>
    %39 = arith.addf %37, %38 : vector<48x128xf32>
    %c47_i32_19 = arith.constant 47 : i32
    %40 = tpu.dynamic_rotate %37 by %c47_i32_19 dim 0 : vector<48x128xf32>, i32 -> vector<48x128xf32>
    %41 = arith.addf %39, %40 : vector<48x128xf32>
    %42 = arith.mulf %41, %4 : vector<48x128xf32>
    %43 = arith.mulf %13, %22 : vector<48x128xf32>
    %44 = arith.subf %32, %43 : vector<48x128xf32>
    %45 = arith.mulf %13, %13 : vector<48x128xf32>
    %46 = arith.subf %42, %45 : vector<48x128xf32>
    %cst = arith.constant 9.99999993E-9 : f32
    %47 = vector.broadcast %cst : f32 to vector<48x128xf32>
    %48 = arith.addf %46, %47 : vector<48x128xf32>
    %49 = tpu.reciprocal %48 : vector<48x128xf32> -> vector<48x128xf32>
    %50 = arith.mulf %44, %49 : vector<48x128xf32>
    %51 = arith.mulf %50, %13 : vector<48x128xf32>
    %52 = arith.subf %22, %51 : vector<48x128xf32>
    %c1_i32_20 = arith.constant 1 : i32
    %53 = tpu.dynamic_rotate %50 by %c1_i32_20 dim 1 : vector<48x128xf32>, i32 -> vector<48x128xf32>
    %54 = arith.addf %50, %53 : vector<48x128xf32>
    %c127_i32_21 = arith.constant 127 : i32
    %55 = tpu.dynamic_rotate %50 by %c127_i32_21 dim 1 : vector<48x128xf32>, i32 -> vector<48x128xf32>
    %56 = arith.addf %54, %55 : vector<48x128xf32>
    %c1_i32_22 = arith.constant 1 : i32
    %57 = tpu.dynamic_rotate %56 by %c1_i32_22 dim 0 : vector<48x128xf32>, i32 -> vector<48x128xf32>
    %58 = arith.addf %56, %57 : vector<48x128xf32>
    %c47_i32_23 = arith.constant 47 : i32
    %59 = tpu.dynamic_rotate %56 by %c47_i32_23 dim 0 : vector<48x128xf32>, i32 -> vector<48x128xf32>
    %60 = arith.addf %58, %59 : vector<48x128xf32>
    %61 = arith.mulf %60, %4 : vector<48x128xf32>
    %c1_i32_24 = arith.constant 1 : i32
    %62 = tpu.dynamic_rotate %52 by %c1_i32_24 dim 1 : vector<48x128xf32>, i32 -> vector<48x128xf32>
    %63 = arith.addf %52, %62 : vector<48x128xf32>
    %c127_i32_25 = arith.constant 127 : i32
    %64 = tpu.dynamic_rotate %52 by %c127_i32_25 dim 1 : vector<48x128xf32>, i32 -> vector<48x128xf32>
    %65 = arith.addf %63, %64 : vector<48x128xf32>
    %c1_i32_26 = arith.constant 1 : i32
    %66 = tpu.dynamic_rotate %65 by %c1_i32_26 dim 0 : vector<48x128xf32>, i32 -> vector<48x128xf32>
    %67 = arith.addf %65, %66 : vector<48x128xf32>
    %c47_i32_27 = arith.constant 47 : i32
    %68 = tpu.dynamic_rotate %65 by %c47_i32_27 dim 0 : vector<48x128xf32>, i32 -> vector<48x128xf32>
    %69 = arith.addf %67, %68 : vector<48x128xf32>
    %70 = arith.mulf %69, %4 : vector<48x128xf32>
    %71 = arith.mulf %61, %1 : vector<48x128xf32>
    %72 = arith.addf %71, %70 : vector<48x128xf32>
    %c0_28 = arith.constant 0 : index
    %c0_29 = arith.constant 0 : index
    %c0_30 = arith.constant 0 : index
    %73 = vector.load %arg4[%c0_28, %c0_29, %c0_30] : memref<1x48x128xf32, #tpu.memory_space<vmem>>, vector<1x48x128xf32>
    %74 = vector.shape_cast %73 : vector<1x48x128xf32> to vector<48x128xf32>
    %75 = vector.shape_cast %72 : vector<48x128xf32> to vector<1x48x128xf32>
    tpu.vector_store %arg4[%c0_28, %c0_29, %c0_30], %75 {strides = array<i32>} : memref<1x48x128xf32, #tpu.memory_space<vmem>>, vector<1x48x128xf32>,
    return
  }
  func.func @transform_0(%arg0: i32) -> (i32, i32) {
    %c0_i32 = arith.constant 0 : i32
    %c0_i32_0 = arith.constant 0 : i32
    %c0_i32_1 = arith.constant 0 : i32
    return %c0_i32, %c0_i32_0 : i32, i32
  }
  func.func @transform_1(%arg0: i32) -> (i32, i32, i32) {
    %c0_i32 = arith.constant 0 : i32
    %c0_i32_0 = arith.constant 0 : i32
    %c0_i32_1 = arith.constant 0 : i32
    return %arg0, %c0_i32, %c0_i32_0 : i32, i32, i32
  }
  func.func @transform_2(%arg0: i32) -> (i32, i32, i32) {
    %c0_i32 = arith.constant 0 : i32
    %c0_i32_0 = arith.constant 0 : i32
    %c0_i32_1 = arith.constant 0 : i32
    return %arg0, %c0_i32, %c0_i32_0 : i32, i32, i32
  }
  func.func @transform_3(%arg0: i32) -> (i32, i32, i32) {
    %c0_i32 = arith.constant 0 : i32
    %c0_i32_0 = arith.constant 0 : i32
    %c0_i32_1 = arith.constant 0 : i32
    return %arg0, %c0_i32, %c0_i32_0 : i32, i32, i32
  }
}

</mosaic_0001>

<llo_original>
// kernel: tpu_custom_call.1
$region0: #{tpu_custom_call.1}
  #allocation0 [shape = 'u32[]', space=smem, size = 0x4, offset = 0x4, fixed_abs, tag = 'smem constant byte address 0x4 - core index']
  #allocation1 [shape = 'u32[144,128]{1,0:T(1,128)}', space=vmem, size = 0x12000, scoped, tag = 'internal scratch']
  %s0 = inlined_call_operand.hbm [shape: f32[48,128], index: 0, kind: input, shape index: {}]
  %s1 = inlined_call_operand.hbm [shape: f32[1,48,128], index: 1, kind: input, shape index: {}]
  %s2 = inlined_call_operand.hbm [shape: f32[1,48,128], index: 2, kind: input, shape index: {}]
  %s3 = inlined_call_operand.hbm [shape: f32[1,48,128], index: 3, kind: output, shape index: {}]
  %s4 = sld [smem:[#allocation0]]
  $region34: #{tpu_custom_call.1} parent=0
    _
  %s6 = ssub.s32 1, %s4
  %s7 = scalar_select 0, %s6, %s4
  $region1: #{tpu_custom_call.1} parent=0
    #allocation2 [shape = 'u8[24576]{0}', space=vmem, size = 0x6000, scoped, tag = 'input window, operand 0, single buffered']
    #allocation3 [shape = 's32[1]{0}', space=sflag, size = 0x4, scoped, tag = 'scoped memory for tpu_custom_call.1']
    #allocation4 [shape = 's32[1]{0}', space=sflag, size = 0x4, scoped, tag = 'scoped memory for tpu_custom_call.1']
    #allocation5 [shape = 'u8[24576]{0}', space=vmem, size = 0x6000, scoped, tag = 'input window, operand 1, single buffered']
    #allocation6 [shape = 's32[1]{0}', space=sflag, size = 0x4, scoped, tag = 'scoped memory for tpu_custom_call.1']
    #allocation7 [shape = 'u8[24576]{0}', space=vmem, size = 0x6000, scoped, tag = 'input window, operand 2, single buffered']
    #allocation8 [shape = 'u8[24576]{0}', space=vmem, size = 0x6000, scoped, tag = 'output window, operand 0, single buffered']
    %8 = vsyncpa [#allocation3], 0
    %9 = vsyncpa [#allocation6], 0
    %10 = vsyncpa [#allocation4], 0
    // Predicated region
    $region2: #{tpu_custom_call.1} parent=1 // pred_check
      _
    $region3: #{tpu_custom_call.1} parent=1 // pred_check_branch
      %12 = sbr.rel (0) target = $region5
    $region4: #{tpu_custom_call.1} parent=1 // pred_region
      %s14 = ssub.s32 768, 768
      %15 = vsyncadd [#allocation3], %s14
      %s16 = sshll.u32 [#allocation2], 4
      %s17 = int_to_ptr.vmem [resolvable:$true] %s16
      %22 = dma.hbm_to_vmem [thread:$0]  %s0, 768, %s17, [#allocation3], 128, 128, 8
    $region5: #{tpu_custom_call.1} parent=1 // pred_fallthru
      _
    // Predicated region
    $region6: #{tpu_custom_call.1} parent=1 // pred_check
      _
    $region7: #{tpu_custom_call.1} parent=1 // pred_check_branch
      %24 = sbr.rel (0) target = $region9
    $region8: #{tpu_custom_call.1} parent=1 // pred_region
      %s26 = ssub.s32 768, 768
      %27 = vsyncadd [#allocation6], %s26
      %s28 = sshll.u32 [#allocation5], 4
      %s29 = int_to_ptr.vmem [resolvable:$true] %s28
      %34 = dma.hbm_to_vmem [thread:$0]  %s1, 768, %s29, [#allocation6], 128, 128, 8
    $region9: #{tpu_custom_call.1} parent=1 // pred_fallthru
      _
    // Predicated region
    $region10: #{tpu_custom_call.1} parent=1 // pred_check
      _
    $region11: #{tpu_custom_call.1} parent=1 // pred_check_branch
      %36 = sbr.rel (0) target = $region13
    $region12: #{tpu_custom_call.1} parent=1 // pred_region
      %s38 = ssub.s32 768, 768
      %39 = vsyncadd [#allocation6], %s38
      %s40 = sshll.u32 [#allocation7], 4
      %s41 = int_to_ptr.vmem [resolvable:$true] %s40
      %46 = dma.hbm_to_vmem [thread:$0]  %s2, 768, %s41, [#allocation6], 128, 128, 8
    $region13: #{tpu_custom_call.1} parent=1 // pred_fallthru
      _
    // Predicated region
    $region14: #{tpu_custom_call.1} parent=1 // pred_check
      _
    $region15: #{tpu_custom_call.1} parent=1 // pred_check_branch
      %48 = sbr.rel (0) target = $region17
    $region16: #{tpu_custom_call.1} parent=1 // pred_region
      %49 = dma.done [#allocation3], 768
    $region17: #{tpu_custom_call.1} parent=1 // pred_fallthru
      _
    // Predicated region
    $region18: #{tpu_custom_call.1} parent=1 // pred_check
      _
    $region19: #{tpu_custom_call.1} parent=1 // pred_check_branch
      %51 = sbr.rel (0) target = $region21
    $region20: #{tpu_custom_call.1} parent=1 // pred_region
      %52 = dma.done [#allocation6], 768
    $region21: #{tpu_custom_call.1} parent=1 // pred_fallthru
      _
    // Predicated region
    $region22: #{tpu_custom_call.1} parent=1 // pred_check
      _
    $region23: #{tpu_custom_call.1} parent=1 // pred_check_branch
      %54 = sbr.rel (0) target = $region25
    $region24: #{tpu_custom_call.1} parent=1 // pred_region
      %55 = dma.done [#allocation6], 768
    $region25: #{tpu_custom_call.1} parent=1 // pred_fallthru
      _
    %v56 = vld [vmem:[#allocation5] sm:$0xff]
    %v57 = vld [vmem:[#allocation5 + $0x8] sm:$0xff]
    %v58 = vld [vmem:[#allocation5 + $0x10] sm:$0xff]
    %v59 = vld [vmem:[#allocation5 + $0x18] sm:$0xff]
    %v60 = vld [vmem:[#allocation5 + $0x20] sm:$0xff]
    %v61 = vld [vmem:[#allocation5 + $0x28] sm:$0xff]
    %v62 = vld [vmem:[#allocation7] sm:$0xff]
    %v63 = vld [vmem:[#allocation7 + $0x8] sm:$0xff]
    %v64 = vld [vmem:[#allocation7 + $0x10] sm:$0xff]
    %v65 = vld [vmem:[#allocation7 + $0x18] sm:$0xff]
    %v66 = vld [vmem:[#allocation7 + $0x20] sm:$0xff]
    %v67 = vld [vmem:[#allocation7 + $0x28] sm:$0xff]
    %v68 = vld [vmem:[#allocation2] sm:$0xff]
    %v69 = vld [vmem:[#allocation2 + $0x8] sm:$0xff]
    %v70 = vld [vmem:[#allocation2 + $0x10] sm:$0xff]
    %v71 = vld [vmem:[#allocation2 + $0x18] sm:$0xff]
    %v72 = vld [vmem:[#allocation2 + $0x20] sm:$0xff]
    %v73 = vld [vmem:[#allocation2 + $0x28] sm:$0xff]
    %74 = vrot.lane.b32.xlu0 %v56, 1
    %v75 = vpop.permute.xlu0 %74
    %76 = vrot.lane.b32.xlu0 %v57, 1
    %v77 = vpop.permute.xlu0 %76
    %78 = vrot.lane.b32.xlu0 %v58, 1
    %v79 = vpop.permute.xlu0 %78
    %80 = vrot.lane.b32.xlu0 %v59, 1
    %v81 = vpop.permute.xlu0 %80
    %82 = vrot.lane.b32.xlu0 %v60, 1
    %v83 = vpop.permute.xlu0 %82
    %84 = vrot.lane.b32.xlu0 %v61, 1
    %v85 = vpop.permute.xlu0 %84
    %v86 = vadd.f32 %v56, %v75
    %v87 = vadd.f32 %v57, %v77
    %v88 = vadd.f32 %v58, %v79
    %v89 = vadd.f32 %v59, %v81
    %v90 = vadd.f32 %v60, %v83
    %v91 = vadd.f32 %v61, %v85
    %92 = vrot.lane.b32.xlu0 %v56, 127
    %v93 = vpop.permute.xlu0 %92
    %94 = vrot.lane.b32.xlu0 %v57, 127
    %v95 = vpop.permute.xlu0 %94
    %96 = vrot.lane.b32.xlu0 %v58, 127
    %v97 = vpop.permute.xlu0 %96
    %98 = vrot.lane.b32.xlu0 %v59, 127
    %v99 = vpop.permute.xlu0 %98
    %100 = vrot.lane.b32.xlu0 %v60, 127
    %v101 = vpop.permute.xlu0 %100
    %102 = vrot.lane.b32.xlu0 %v61, 127
    %v103 = vpop.permute.xlu0 %102
    %v104 = vadd.f32 %v86, %v93
    %v105 = vadd.f32 %v87, %v95
    %v106 = vadd.f32 %v88, %v97
    %v107 = vadd.f32 %v89, %v99
    %v108 = vadd.f32 %v90, %v101
    %v109 = vadd.f32 %v91, %v103
    %v110 = vrot.slane %v104, 7
    %v111 = vrot.slane %v105, 7
    %v112 = vrot.slane %v106, 7
    %v113 = vrot.slane %v107, 7
    %v114 = vrot.slane %v108, 7
    %v115 = vrot.slane %v109, 7
    %v116 = vlaneseq
    %v117 = vshrl.u32 %v116, 7
    %vm118 = vcmp.lt.s32.totalorder %v117, 1
    %v119 = vsel %vm118, %v114, %v115
    %v120 = vsel %vm118, %v113, %v114
    %v121 = vsel %vm118, %v112, %v113
    %v122 = vsel %vm118, %v111, %v112
    %v123 = vsel %vm118, %v110, %v111
    %v124 = vsel %vm118, %v115, %v110
    %v125 = vadd.f32 %v104, %v124
    %v126 = vadd.f32 %v105, %v123
    %v127 = vadd.f32 %v106, %v122
    %v128 = vadd.f32 %v107, %v121
    %v129 = vadd.f32 %v108, %v120
    %v130 = vadd.f32 %v109, %v119
    %v131 = vrot.slane %v104, 1
    %v132 = vrot.slane %v105, 1
    %v133 = vrot.slane %v106, 1
    %v134 = vrot.slane %v107, 1
    %v135 = vrot.slane %v108, 1
    %v136 = vrot.slane %v109, 1
    %vm137 = vcmp.lt.s32.totalorder %v117, 7
    %v138 = vsel %vm137, %v135, %v136
    %v139 = vsel %vm137, %v134, %v135
    %v140 = vsel %vm137, %v133, %v134
    %v141 = vsel %vm137, %v132, %v133
    %v142 = vsel %vm137, %v131, %v132
    %v143 = vsel %vm137, %v136, %v131
    %v144 = vadd.f32 %v125, %v142
    %v145 = vadd.f32 %v126, %v141
    %v146 = vadd.f32 %v127, %v140
    %v147 = vadd.f32 %v128, %v139
    %v148 = vadd.f32 %v129, %v138
    %v149 = vadd.f32 %v130, %v143
    %v150 = vmul.f32 %v144, %v68
    %v151 = vmul.f32 %v145, %v69
    %v152 = vmul.f32 %v146, %v70
    %v153 = vmul.f32 %v147, %v71
    %v154 = vmul.f32 %v148, %v72
    %v155 = vmul.f32 %v149, %v73
    %156 = vrot.lane.b32.xlu0 %v62, 1
    %v157 = vpop.permute.xlu0 %156
    %158 = vrot.lane.b32.xlu0 %v63, 1
    %v159 = vpop.permute.xlu0 %158
    %160 = vrot.lane.b32.xlu0 %v64, 1
    %v161 = vpop.permute.xlu0 %160
    %162 = vrot.lane.b32.xlu0 %v65, 1
    %v163 = vpop.permute.xlu0 %162
    %164 = vrot.lane.b32.xlu0 %v66, 1
    %v165 = vpop.permute.xlu0 %164
    %166 = vrot.lane.b32.xlu0 %v67, 1
    %v167 = vpop.permute.xlu0 %166
    %v168 = vadd.f32 %v62, %v157
    %v169 = vadd.f32 %v63, %v159
    %v170 = vadd.f32 %v64, %v161
    %v171 = vadd.f32 %v65, %v163
    %v172 = vadd.f32 %v66, %v165
    %v173 = vadd.f32 %v67, %v167
    %174 = vrot.lane.b32.xlu0 %v62, 127
    %v175 = vpop.permute.xlu0 %174
    %176 = vrot.lane.b32.xlu0 %v63, 127
    %v177 = vpop.permute.xlu0 %176
    %178 = vrot.lane.b32.xlu0 %v64, 127
    %v179 = vpop.permute.xlu0 %178
    %180 = vrot.lane.b32.xlu0 %v65, 127
    %v181 = vpop.permute.xlu0 %180
    %182 = vrot.lane.b32.xlu0 %v66, 127
    %v183 = vpop.permute.xlu0 %182
    %184 = vrot.lane.b32.xlu0 %v67, 127
    %v185 = vpop.permute.xlu0 %184
    %v186 = vadd.f32 %v168, %v175
    %v187 = vadd.f32 %v169, %v177
    %v188 = vadd.f32 %v170, %v179
    %v189 = vadd.f32 %v171, %v181
    %v190 = vadd.f32 %v172, %v183
    %v191 = vadd.f32 %v173, %v185
    %v192 = vrot.slane %v186, 7
    %v193 = vrot.slane %v187, 7
    %v194 = vrot.slane %v188, 7
    %v195 = vrot.slane %v189, 7
    %v196 = vrot.slane %v190, 7
    %v197 = vrot.slane %v191, 7
    %v198 = vsel %vm118, %v196, %v197
    %v199 = vsel %vm118, %v195, %v196
    %v200 = vsel %vm118, %v194, %v195
    %v201 = vsel %vm118, %v193, %v194
    %v202 = vsel %vm118, %v192, %v193
    %v203 = vsel %vm118, %v197, %v192
    %v204 = vadd.f32 %v186, %v203
    %v205 = vadd.f32 %v187, %v202
    %v206 = vadd.f32 %v188, %v201
    %v207 = vadd.f32 %v189, %v200
    %v208 = vadd.f32 %v190, %v199
    %v209 = vadd.f32 %v191, %v198
    %v210 = vrot.slane %v186, 1
    %v211 = vrot.slane %v187, 1
    %v212 = vrot.slane %v188, 1
    %v213 = vrot.slane %v189, 1
    %v214 = vrot.slane %v190, 1
    %v215 = vrot.slane %v191, 1
    %v216 = vsel %vm137, %v214, %v215
    %v217 = vsel %vm137, %v213, %v214
    %v218 = vsel %vm137, %v212, %v213
    %v219 = vsel %vm137, %v211, %v212
    %v220 = vsel %vm137, %v210, %v211
    %v221 = vsel %vm137, %v215, %v210
    %v222 = vadd.f32 %v204, %v220
    %v223 = vadd.f32 %v205, %v219
    %v224 = vadd.f32 %v206, %v218
    %v225 = vadd.f32 %v207, %v217
    %v226 = vadd.f32 %v208, %v216
    %v227 = vadd.f32 %v209, %v221
    %v228 = vmul.f32 %v222, %v68
    %v229 = vmul.f32 %v223, %v69
    %v230 = vmul.f32 %v224, %v70
    %v231 = vmul.f32 %v225, %v71
    %v232 = vmul.f32 %v226, %v72
    %v233 = vmul.f32 %v227, %v73
    %v234 = vmul.f32 %v56, %v62
    %v235 = vmul.f32 %v57, %v63
    %v236 = vmul.f32 %v58, %v64
    %v237 = vmul.f32 %v59, %v65
    %v238 = vmul.f32 %v60, %v66
    %v239 = vmul.f32 %v61, %v67
    %240 = vrot.lane.b32.xlu0 %v234, 1
    %v241 = vpop.permute.xlu0 %240
    %242 = vrot.lane.b32.xlu0 %v235, 1
    %v243 = vpop.permute.xlu0 %242
    %244 = vrot.lane.b32.xlu0 %v236, 1
    %v245 = vpop.permute.xlu0 %244
    %246 = vrot.lane.b32.xlu0 %v237, 1
    %v247 = vpop.permute.xlu0 %246
    %248 = vrot.lane.b32.xlu0 %v238, 1
    %v249 = vpop.permute.xlu0 %248
    %250 = vrot.lane.b32.xlu0 %v239, 1
    %v251 = vpop.permute.xlu0 %250
    %v252 = vadd.f32 %v234, %v241
    %v253 = vadd.f32 %v235, %v243
    %v254 = vadd.f32 %v236, %v245
    %v255 = vadd.f32 %v237, %v247
    %v256 = vadd.f32 %v238, %v249
    %v257 = vadd.f32 %v239, %v251
    %258 = vrot.lane.b32.xlu0 %v234, 127
    %v259 = vpop.permute.xlu0 %258
    %260 = vrot.lane.b32.xlu0 %v235, 127
    %v261 = vpop.permute.xlu0 %260
    %262 = vrot.lane.b32.xlu0 %v236, 127
    %v263 = vpop.permute.xlu0 %262
    %264 = vrot.lane.b32.xlu0 %v237, 127
    %v265 = vpop.permute.xlu0 %264
    %266 = vrot.lane.b32.xlu0 %v238, 127
    %v267 = vpop.permute.xlu0 %266
    %268 = vrot.lane.b32.xlu0 %v239, 127
    %v269 = vpop.permute.xlu0 %268
    %v270 = vadd.f32 %v252, %v259
    %v271 = vadd.f32 %v253, %v261
    %v272 = vadd.f32 %v254, %v263
    %v273 = vadd.f32 %v255, %v265
    %v274 = vadd.f32 %v256, %v267
    %v275 = vadd.f32 %v257, %v269
    %v276 = vrot.slane %v270, 7
    %v277 = vrot.slane %v271, 7
    %v278 = vrot.slane %v272, 7
    %v279 = vrot.slane %v273, 7
    %v280 = vrot.slane %v274, 7
    %v281 = vrot.slane %v275, 7
    %v282 = vsel %vm118, %v280, %v281
    %v283 = vsel %vm118, %v279, %v280
    %v284 = vsel %vm118, %v278, %v279
    %v285 = vsel %vm118, %v277, %v278
    %v286 = vsel %vm118, %v276, %v277
    %v287 = vsel %vm118, %v281, %v276
    %v288 = vadd.f32 %v270, %v287
    %v289 = vadd.f32 %v271, %v286
    %v290 = vadd.f32 %v272, %v285
    %v291 = vadd.f32 %v273, %v284
    %v292 = vadd.f32 %v274, %v283
    %v293 = vadd.f32 %v275, %v282
    %v294 = vrot.slane %v270, 1
    %v295 = vrot.slane %v271, 1
    %v296 = vrot.slane %v272, 1
    %v297 = vrot.slane %v273, 1
    %v298 = vrot.slane %v274, 1
    %v299 = vrot.slane %v275, 1
    %v300 = vsel %vm137, %v298, %v299
    %v301 = vsel %vm137, %v297, %v298
    %v302 = vsel %vm137, %v296, %v297
    %v303 = vsel %vm137, %v295, %v296
    %v304 = vsel %vm137, %v294, %v295
    %v305 = vsel %vm137, %v299, %v294
    %v306 = vadd.f32 %v288, %v304
    %v307 = vadd.f32 %v289, %v303
    %v308 = vadd.f32 %v290, %v302
    %v309 = vadd.f32 %v291, %v301
    %v310 = vadd.f32 %v292, %v300
    %v311 = vadd.f32 %v293, %v305
    %v312 = vmul.f32 %v306, %v68
    %v313 = vmul.f32 %v307, %v69
    %v314 = vmul.f32 %v308, %v70
    %v315 = vmul.f32 %v309, %v71
    %v316 = vmul.f32 %v310, %v72
    %v317 = vmul.f32 %v311, %v73
    %v318 = vmul.f32 %v56, %v56
    %v319 = vmul.f32 %v57, %v57
    %v320 = vmul.f32 %v58, %v58
    %v321 = vmul.f32 %v59, %v59
    %v322 = vmul.f32 %v60, %v60
    %v323 = vmul.f32 %v61, %v61
    %324 = vrot.lane.b32.xlu0 %v318, 1
    %v325 = vpop.permute.xlu0 %324
    %326 = vrot.lane.b32.xlu0 %v319, 1
    %v327 = vpop.permute.xlu0 %326
    %328 = vrot.lane.b32.xlu0 %v320, 1
    %v329 = vpop.permute.xlu0 %328
    %330 = vrot.lane.b32.xlu0 %v321, 1
    %v331 = vpop.permute.xlu0 %330
    %332 = vrot.lane.b32.xlu0 %v322, 1
    %v333 = vpop.permute.xlu0 %332
    %334 = vrot.lane.b32.xlu0 %v323, 1
    %v335 = vpop.permute.xlu0 %334
    %v336 = vadd.f32 %v318, %v325
    %v337 = vadd.f32 %v319, %v327
    %v338 = vadd.f32 %v320, %v329
    %v339 = vadd.f32 %v321, %v331
    %v340 = vadd.f32 %v322, %v333
    %v341 = vadd.f32 %v323, %v335
    %342 = vrot.lane.b32.xlu0 %v318, 127
    %v343 = vpop.permute.xlu0 %342
    %344 = vrot.lane.b32.xlu0 %v319, 127
    %v345 = vpop.permute.xlu0 %344
    %346 = vrot.lane.b32.xlu0 %v320, 127
    %v347 = vpop.permute.xlu0 %346
    %348 = vrot.lane.b32.xlu0 %v321, 127
    %v349 = vpop.permute.xlu0 %348
    %350 = vrot.lane.b32.xlu0 %v322, 127
    %v351 = vpop.permute.xlu0 %350
    %352 = vrot.lane.b32.xlu0 %v323, 127
    %v353 = vpop.permute.xlu0 %352
    %v354 = vadd.f32 %v336, %v343
    %v355 = vadd.f32 %v337, %v345
    %v356 = vadd.f32 %v338, %v347
    %v357 = vadd.f32 %v339, %v349
    %v358 = vadd.f32 %v340, %v351
    %v359 = vadd.f32 %v341, %v353
    %v360 = vrot.slane %v354, 7
    %v361 = vrot.slane %v355, 7
    %v362 = vrot.slane %v356, 7
    %v363 = vrot.slane %v357, 7
    %v364 = vrot.slane %v358, 7
    %v365 = vrot.slane %v359, 7
    %v366 = vsel %vm118, %v364, %v365
    %v367 = vsel %vm118, %v363, %v364
    %v368 = vsel %vm118, %v362, %v363
    %v369 = vsel %vm118, %v361, %v362
    %v370 = vsel %vm118, %v360, %v361
    %v371 = vsel %vm118, %v365, %v360
    %v372 = vadd.f32 %v354, %v371
    %v373 = vadd.f32 %v355, %v370
    %v374 = vadd.f32 %v356, %v369
    %v375 = vadd.f32 %v357, %v368
    %v376 = vadd.f32 %v358, %v367
    %v377 = vadd.f32 %v359, %v366
    %v378 = vrot.slane %v354, 1
    %v379 = vrot.slane %v355, 1
    %v380 = vrot.slane %v356, 1
    %v381 = vrot.slane %v357, 1
    %v382 = vrot.slane %v358, 1
    %v383 = vrot.slane %v359, 1
    %v384 = vsel %vm137, %v382, %v383
    %v385 = vsel %vm137, %v381, %v382
    %v386 = vsel %vm137, %v380, %v381
    %v387 = vsel %vm137, %v379, %v380
    %v388 = vsel %vm137, %v378, %v379
    %v389 = vsel %vm137, %v383, %v378
    %v390 = vadd.f32 %v372, %v388
    %v391 = vadd.f32 %v373, %v387
    %v392 = vadd.f32 %v374, %v386
    %v393 = vadd.f32 %v375, %v385
    %v394 = vadd.f32 %v376, %v384
    %v395 = vadd.f32 %v377, %v389
    %v396 = vmul.f32 %v390, %v68
    %v397 = vmul.f32 %v391, %v69
    %v398 = vmul.f32 %v392, %v70
    %v399 = vmul.f32 %v393, %v71
    %v400 = vmul.f32 %v394, %v72
    %v401 = vmul.f32 %v395, %v73
    %v402 = vmul.f32 %v150, %v228
    %v403 = vmul.f32 %v151, %v229
    %v404 = vmul.f32 %v152, %v230
    %v405 = vmul.f32 %v153, %v231
    %v406 = vmul.f32 %v154, %v232
    %v407 = vmul.f32 %v155, %v233
    %v408 = vsub.f32 %v312, %v402
    %v409 = vsub.f32 %v313, %v403
    %v410 = vsub.f32 %v314, %v404
    %v411 = vsub.f32 %v315, %v405
    %v412 = vsub.f32 %v316, %v406
    %v413 = vsub.f32 %v317, %v407
    %v414 = vmul.f32 %v150, %v150
    %v415 = vmul.f32 %v151, %v151
    %v416 = vmul.f32 %v152, %v152
    %v417 = vmul.f32 %v153, %v153
    %v418 = vmul.f32 %v154, %v154
    %v419 = vmul.f32 %v155, %v155
    %v420 = vsub.f32 %v396, %v414
    %v421 = vsub.f32 %v397, %v415
    %v422 = vsub.f32 %v398, %v416
    %v423 = vsub.f32 %v399, %v417
    %v424 = vsub.f32 %v400, %v418
    %v425 = vsub.f32 %v401, %v419
    %v426 = vadd.f32 %v420, 1e-08
    %v427 = vadd.f32 %v421, 1e-08
    %v428 = vadd.f32 %v422, 1e-08
    %v429 = vadd.f32 %v423, 1e-08
    %v430 = vadd.f32 %v424, 1e-08
    %v431 = vadd.f32 %v425, 1e-08
    %v432 = vrcp.pop %v426
    %v433 = vrcp.pop %v427
    %v434 = vrcp.pop %v428
    %v435 = vrcp.pop %v429
    %v436 = vrcp.pop %v430
    %v437 = vrcp.pop %v431
    %v438 = vmul.f32 %v408, %v432
    %v439 = vmul.f32 %v409, %v433
    %v440 = vmul.f32 %v410, %v434
    %v441 = vmul.f32 %v411, %v435
    %v442 = vmul.f32 %v412, %v436
    %v443 = vmul.f32 %v413, %v437
    %v444 = vmul.f32 %v438, %v150
    %v445 = vmul.f32 %v439, %v151
    %v446 = vmul.f32 %v440, %v152
    %v447 = vmul.f32 %v441, %v153
    %v448 = vmul.f32 %v442, %v154
    %v449 = vmul.f32 %v443, %v155
    %v450 = vsub.f32 %v228, %v444
    %v451 = vsub.f32 %v229, %v445
    %v452 = vsub.f32 %v230, %v446
    %v453 = vsub.f32 %v231, %v447
    %v454 = vsub.f32 %v232, %v448
    %v455 = vsub.f32 %v233, %v449
    %456 = vrot.lane.b32.xlu0 %v438, 1
    %v457 = vpop.permute.xlu0 %456
    %458 = vrot.lane.b32.xlu0 %v439, 1
    %v459 = vpop.permute.xlu0 %458
    %460 = vrot.lane.b32.xlu0 %v440, 1
    %v461 = vpop.permute.xlu0 %460
    %462 = vrot.lane.b32.xlu0 %v441, 1
    %v463 = vpop.permute.xlu0 %462
    %464 = vrot.lane.b32.xlu0 %v442, 1
    %v465 = vpop.permute.xlu0 %464
    %466 = vrot.lane.b32.xlu0 %v443, 1
    %v467 = vpop.permute.xlu0 %466
    %v468 = vadd.f32 %v438, %v457
    %v469 = vadd.f32 %v439, %v459
    %v470 = vadd.f32 %v440, %v461
    %v471 = vadd.f32 %v441, %v463
    %v472 = vadd.f32 %v442, %v465
    %v473 = vadd.f32 %v443, %v467
    %474 = vrot.lane.b32.xlu0 %v438, 127
    %v475 = vpop.permute.xlu0 %474
    %476 = vrot.lane.b32.xlu0 %v439, 127
    %v477 = vpop.permute.xlu0 %476
    %478 = vrot.lane.b32.xlu0 %v440, 127
    %v479 = vpop.permute.xlu0 %478
    %480 = vrot.lane.b32.xlu0 %v441, 127
    %v481 = vpop.permute.xlu0 %480
    %482 = vrot.lane.b32.xlu0 %v442, 127
    %v483 = vpop.permute.xlu0 %482
    %484 = vrot.lane.b32.xlu0 %v443, 127
    %v485 = vpop.permute.xlu0 %484
    %v486 = vadd.f32 %v468, %v475
    %v487 = vadd.f32 %v469, %v477
    %v488 = vadd.f32 %v470, %v479
    %v489 = vadd.f32 %v471, %v481
    %v490 = vadd.f32 %v472, %v483
    %v491 = vadd.f32 %v473, %v485
    %v492 = vrot.slane %v486, 7
    %v493 = vrot.slane %v487, 7
    %v494 = vrot.slane %v488, 7
    %v495 = vrot.slane %v489, 7
    %v496 = vrot.slane %v490, 7
    %v497 = vrot.slane %v491, 7
    %v498 = vsel %vm118, %v496, %v497
    %v499 = vsel %vm118, %v495, %v496
    %v500 = vsel %vm118, %v494, %v495
    %v501 = vsel %vm118, %v493, %v494
    %v502 = vsel %vm118, %v492, %v493
    %v503 = vsel %vm118, %v497, %v492
    %v504 = vadd.f32 %v486, %v503
    %v505 = vadd.f32 %v487, %v502
    %v506 = vadd.f32 %v488, %v501
    %v507 = vadd.f32 %v489, %v500
    %v508 = vadd.f32 %v490, %v499
    %v509 = vadd.f32 %v491, %v498
    %v510 = vrot.slane %v486, 1
    %v511 = vrot.slane %v487, 1
    %v512 = vrot.slane %v488, 1
    %v513 = vrot.slane %v489, 1
    %v514 = vrot.slane %v490, 1
    %v515 = vrot.slane %v491, 1
    %v516 = vsel %vm137, %v514, %v515
    %v517 = vsel %vm137, %v513, %v514
    %v518 = vsel %vm137, %v512, %v513
    %v519 = vsel %vm137, %v511, %v512
    %v520 = vsel %vm137, %v510, %v511
    %v521 = vsel %vm137, %v515, %v510
    %v522 = vadd.f32 %v504, %v520
    %v523 = vadd.f32 %v505, %v519
    %v524 = vadd.f32 %v506, %v518
    %v525 = vadd.f32 %v507, %v517
    %v526 = vadd.f32 %v508, %v516
    %v527 = vadd.f32 %v509, %v521
    %v528 = vmul.f32 %v522, %v68
    %v529 = vmul.f32 %v523, %v69
    %v530 = vmul.f32 %v524, %v70
    %v531 = vmul.f32 %v525, %v71
    %v532 = vmul.f32 %v526, %v72
    %v533 = vmul.f32 %v527, %v73
    %534 = vrot.lane.b32.xlu0 %v450, 1
    %v535 = vpop.permute.xlu0 %534
    %536 = vrot.lane.b32.xlu0 %v451, 1
    %v537 = vpop.permute.xlu0 %536
    %538 = vrot.lane.b32.xlu0 %v452, 1
    %v539 = vpop.permute.xlu0 %538
    %540 = vrot.lane.b32.xlu0 %v453, 1
    %v541 = vpop.permute.xlu0 %540
    %542 = vrot.lane.b32.xlu0 %v454, 1
    %v543 = vpop.permute.xlu0 %542
    %544 = vrot.lane.b32.xlu0 %v455, 1
    %v545 = vpop.permute.xlu0 %544
    %v546 = vadd.f32 %v450, %v535
    %v547 = vadd.f32 %v451, %v537
    %v548 = vadd.f32 %v452, %v539
    %v549 = vadd.f32 %v453, %v541
    %v550 = vadd.f32 %v454, %v543
    %v551 = vadd.f32 %v455, %v545
    %552 = vrot.lane.b32.xlu0 %v450, 127
    %v553 = vpop.permute.xlu0 %552
    %554 = vrot.lane.b32.xlu0 %v451, 127
    %v555 = vpop.permute.xlu0 %554
    %556 = vrot.lane.b32.xlu0 %v452, 127
    %v557 = vpop.permute.xlu0 %556
    %558 = vrot.lane.b32.xlu0 %v453, 127
    %v559 = vpop.permute.xlu0 %558
    %560 = vrot.lane.b32.xlu0 %v454, 127
    %v561 = vpop.permute.xlu0 %560
    %562 = vrot.lane.b32.xlu0 %v455, 127
    %v563 = vpop.permute.xlu0 %562
    %v564 = vadd.f32 %v546, %v553
    %v565 = vadd.f32 %v547, %v555
    %v566 = vadd.f32 %v548, %v557
    %v567 = vadd.f32 %v549, %v559
    %v568 = vadd.f32 %v550, %v561
    %v569 = vadd.f32 %v551, %v563
    %v570 = vrot.slane %v564, 7
    %v571 = vrot.slane %v565, 7
    %v572 = vrot.slane %v566, 7
    %v573 = vrot.slane %v567, 7
    %v574 = vrot.slane %v568, 7
    %v575 = vrot.slane %v569, 7
    %v576 = vsel %vm118, %v574, %v575
    %v577 = vsel %vm118, %v573, %v574
    %v578 = vsel %vm118, %v572, %v573
    %v579 = vsel %vm118, %v571, %v572
    %v580 = vsel %vm118, %v570, %v571
    %v581 = vsel %vm118, %v575, %v570
    %v582 = vadd.f32 %v564, %v581
    %v583 = vadd.f32 %v565, %v580
    %v584 = vadd.f32 %v566, %v579
    %v585 = vadd.f32 %v567, %v578
    %v586 = vadd.f32 %v568, %v577
    %v587 = vadd.f32 %v569, %v576
    %v588 = vrot.slane %v564, 1
    %v589 = vrot.slane %v565, 1
    %v590 = vrot.slane %v566, 1
    %v591 = vrot.slane %v567, 1
    %v592 = vrot.slane %v568, 1
    %v593 = vrot.slane %v569, 1
    %v594 = vsel %vm137, %v592, %v593
    %v595 = vsel %vm137, %v591, %v592
    %v596 = vsel %vm137, %v590, %v591
    %v597 = vsel %vm137, %v589, %v590
    %v598 = vsel %vm137, %v588, %v589
    %v599 = vsel %vm137, %v593, %v588
    %v600 = vadd.f32 %v582, %v598
    %v601 = vadd.f32 %v583, %v597
    %v602 = vadd.f32 %v584, %v596
    %v603 = vadd.f32 %v585, %v595
    %v604 = vadd.f32 %v586, %v594
    %v605 = vadd.f32 %v587, %v599
    %v606 = vmul.f32 %v600, %v68
    %v607 = vmul.f32 %v601, %v69
    %v608 = vmul.f32 %v602, %v70
    %v609 = vmul.f32 %v603, %v71
    %v610 = vmul.f32 %v604, %v72
    %v611 = vmul.f32 %v605, %v73
    %v612 = vmul.f32 %v528, %v56
    %v613 = vmul.f32 %v529, %v57
    %v614 = vmul.f32 %v530, %v58
    %v615 = vmul.f32 %v531, %v59
    %v616 = vmul.f32 %v532, %v60
    %v617 = vmul.f32 %v533, %v61
    %v618 = vadd.f32 %v612, %v606
    %v619 = vadd.f32 %v613, %v607
    %v620 = vadd.f32 %v614, %v608
    %v621 = vadd.f32 %v615, %v609
    %v622 = vadd.f32 %v616, %v610
    %v623 = vadd.f32 %v617, %v611
    %624 = vst [vmem:[#allocation8] sm:$0xff] %v618
    %625 = vst [vmem:[#allocation8 + $0x8] sm:$0xff] %v619
    %626 = vst [vmem:[#allocation8 + $0x10] sm:$0xff] %v620
    %627 = vst [vmem:[#allocation8 + $0x18] sm:$0xff] %v621
    %628 = vst [vmem:[#allocation8 + $0x20] sm:$0xff] %v622
    %629 = vst [vmem:[#allocation8 + $0x28] sm:$0xff] %v623
    // Predicated region
    $region26: #{tpu_custom_call.1} parent=1 // pred_check
      _
    $region27: #{tpu_custom_call.1} parent=1 // pred_check_branch
      %631 = sbr.rel (0) target = $region29
    $region28: #{tpu_custom_call.1} parent=1 // pred_region
      %s633 = ssub.s32 768, 768
      %634 = vsyncadd [#allocation4], %s633
      %s635 = sshll.u32 [#allocation8], 4
      %s636 = int_to_ptr.vmem [resolvable:$true] %s635
      %641 = dma.vmem_to_hbm [thread:$0]  %s636, 768, %s3, [#allocation4], 128, 128, 8
    $region29: #{tpu_custom_call.1} parent=1 // pred_fallthru
      _
    // Predicated region
    $region30: #{tpu_custom_call.1} parent=1 // pred_check
      _
    $region31: #{tpu_custom_call.1} parent=1 // pred_check_branch
      %643 = sbr.rel (0) target = $region33
    $region32: #{tpu_custom_call.1} parent=1 // pred_region
      %644 = dma.done [#allocation4], 768
    $region33: #{tpu_custom_call.1} parent=1 // pred_fallthru
      _
    %645 = vsyncpa [#allocation3], 1
    %646 = vsyncpa [#allocation6], 1
    %647 = vsyncpa [#allocation4], 1

</llo_original>
